<compile_context>
chip_gen: v7x
topology: tpu7x:2x2x1
jax: 0.10.0
libtpu: 0.0.40
codegen_flags: <defaults>
</compile_context>

<pallas_src>
import math

import jax
import jax.numpy as jnp
from jax.experimental import pallas as pl
from jax.experimental.pallas import tpu as pltpu


# ----------------------------------------------------------------------------
# Kernel: one batch tile of the attention-pooling forward pass.
# ----------------------------------------------------------------------------
def _attention_kernel(x_ref, w_ref, b_ref, o_ref):
    """x_ref: (Bb, T, F) native dtype, w_ref: (F, 1) f32, b_ref: (T, 1) f32,
    o_ref: (Bb, F)."""
    x = x_ref[...].astype(jnp.float32)               # upcast once, in VMEM

    # Scores: batched matvec on the MXU -> (Bb, T, 1), naturally sublane=T.
    eij = jnp.einsum("btf,fo->bto", x, w_ref[...],
                     preferred_element_type=jnp.float32)
    eij = eij + b_ref[...]                           # (T, 1) broadcast over batch
    eij = jnp.tanh(eij)                              # EUP
    a = jnp.exp(eij)                                 # EUP, (Bb, T, 1)

    denom = jnp.sum(a, axis=1, keepdims=True)        # (Bb, 1, 1)
    # NOTE: epsilon added AFTER normalization, exactly as in the torch module.
    a = a * pl.reciprocal(denom) + 1e-10

    # Weighted sum over the step axis -> (Bb, F); lane-dense store.
    o_ref[...] = jnp.sum(x * a, axis=1).astype(o_ref.dtype)


# ----------------------------------------------------------------------------
# Helpers: generation-aware block sizing / VMEM budgeting.
# ----------------------------------------------------------------------------
def _vmem_capacity_bytes():
    try:
        return int(pltpu.get_tpu_info().vmem_capacity_bytes)
    except Exception:
        return 64 << 20  # conservative (v7x) fallback


def _pick_batch_block(B, T, F, itemsize, vmem_cap):
    row_bytes = max(T * F * itemsize, 1)
    # Target ~8 MiB per x buffer (the pipeline double-buffers it), bounded by VMEM.
    budget = min(8 << 20, max(vmem_cap // 8, 1 << 20))
    bb = int(max(8, min(budget // row_bytes, 1024)))
    bb -= bb % 8
    if bb >= B:
        if B >= 16:
            # Everything would fit in one block: keep >=2 grid steps so the
            # "parallel" batch axis can span both v7x TensorCores.
            half = (B + 1) // 2
            bb = max(8, ((half + 7) // 8) * 8)
        else:
            bb = B
    return min(bb, B)


# ----------------------------------------------------------------------------
# JAX wrapper: layout plumbing + pallas_call setup (batch-tiled grid).
# ----------------------------------------------------------------------------
def attention_forward(x, weight, bias, *, batch_block=None):
    """Attention forward.

    x:      (B, T, F)  any float dtype (kept native; upcast inside the kernel)
    weight: (F, 1)     parameter (same layout as the torch parameter)
    bias:   (T,)       parameter
    returns (B, F)     in x.dtype
    """
    B, T, F = x.shape
    out_dtype = x.dtype
    itemsize = jnp.dtype(x.dtype).itemsize

    w_col = weight.reshape(F, 1).astype(jnp.float32)   # tiny param, f32
    b_col = bias.reshape(T, 1).astype(jnp.float32)     # (T, 1): sublane=T layout

    vmem_cap = _vmem_capacity_bytes()
    bb = batch_block if batch_block is not None else _pick_batch_block(
        B, T, F, itemsize, vmem_cap)
    bb = min(bb, B)
    grid = (pl.cdiv(B, bb),)

    # Advisory cost estimate for XLA's scheduler.
    cost = pl.CostEstimate(
        flops=int(4 * B * T * F),
        transcendentals=int(3 * B * T),
        bytes_accessed=int(itemsize * B * T * F
                           + jnp.dtype(out_dtype).itemsize * B * F
                           + 4 * (F + T)),
    )

    # VMEM budget: double-buffered x block + output block + params + headroom,
    # capped at 3/4 of this generation's physical VMEM (48 MiB on v7x).
    vmem_need = (2 * bb * T * F * itemsize
                 + 2 * bb * F * jnp.dtype(out_dtype).itemsize
                 + 8 * (F + T)
                 + (2 << 20))
    vmem_limit = int(min(max(vmem_need, 8 << 20), (vmem_cap * 3) // 4))

    return pl.pallas_call(
        _attention_kernel,
        out_shape=jax.ShapeDtypeStruct((B, F), out_dtype),
        grid_spec=pltpu.PrefetchScalarGridSpec(
            num_scalar_prefetch=0,
            grid=grid,
            in_specs=[
                pl.BlockSpec((bb, T, F), lambda i: (i, 0, 0)),   # batch tile of x
                pl.BlockSpec((F, 1), lambda i: (0, 0)),          # attention weight
                pl.BlockSpec((T, 1), lambda i: (0, 0)),          # step bias (T,1)
            ],
            out_specs=pl.BlockSpec((bb, F), lambda i: (i, 0)),
        ),
        compiler_params=pltpu.CompilerParams(
            dimension_semantics=("parallel",),
            vmem_limit_bytes=vmem_limit,
        ),
        cost_estimate=cost,
    )(x, w_col, b_col)


# ----------------------------------------------------------------------------
# Pure-JAX reference (mirrors the torch forward) for a correctness check.
# ----------------------------------------------------------------------------
def attention_reference(x, weight, bias):
    x = x.astype(jnp.float32)
    eij = jnp.einsum("btf,fo->bto", x, weight.astype(jnp.float32))[..., 0]
    eij = eij + bias.astype(jnp.float32)[None, :]
    eij = jnp.tanh(eij)
    a = jnp.exp(eij)
    a = a / jnp.sum(a, axis=1, keepdims=True) + 1e-10
    return jnp.sum(x * a[:, :, None], axis=1)


if __name__ == "__main__":
    # Small shapes consistent with the module (the real model used step_dim=70,
    # feature_dim=192); F=128 keeps the output lane-dense in the demo.
    B, T, F = 4, 16, 128

    key = jax.random.PRNGKey(0)
    kx, kw, kb = jax.random.split(key, 3)
    x = jax.random.normal(kx, (B, T, F), jnp.float32)
    # xavier_uniform_ on a (F, 1) weight; small random bias so that path is
    # actually exercised.
    bound = math.sqrt(6.0 / (F + 1))
    weight = jax.random.uniform(kw, (F, 1), jnp.float32, -bound, bound)
    bias = 0.1 * jax.random.normal(kb, (T,), jnp.float32)

    out = jax.jit(attention_forward)(x, weight, bias)
    out = jax.block_until_ready(out)

    ref = attention_reference(x, weight, bias)
    assert out.shape == (B, F), out.shape
    assert bool(jnp.all(jnp.isfinite(out)))
    assert bool(jnp.allclose(out.astype(jnp.float32), ref, rtol=1e-4, atol=1e-5)), \
        float(jnp.max(jnp.abs(out.astype(jnp.float32) - ref)))
    print("KERNEL_OK")
</pallas_src>

<mosaic_0001>
module attributes {stable_mosaic.version = 11 : i64} {
  func.func @_attention_kernel(%arg0: i32, %arg1: memref<4x16x128xf32, #tpu.memory_space<vmem>>, %arg2: memref<128x1xf32, #tpu.memory_space<vmem>>, %arg3: memref<16x1xf32, #tpu.memory_space<vmem>>, %arg4: memref<4x128xf32, #tpu.memory_space<vmem>>) attributes {dimension_semantics = [#tpu.dimension_semantics<parallel>], iteration_bounds = array<i64: 1>, scalar_prefetch = 0 : i64, scratch_operands = 0 : i64, tpu.core_type = #tpu.core_type<tc>, window_params = [{transform_indices = @transform_0, window_bounds = array<i64: 4, 16, 128>}, {pipeline_mode = #tpu.pipeline_mode<synchronous>, transform_indices = @transform_1, window_bounds = array<i64: 128, 1>}, {pipeline_mode = #tpu.pipeline_mode<synchronous>, transform_indices = @transform_2, window_bounds = array<i64: 16, 1>}, {transform_indices = @transform_3, window_bounds = array<i64: 4, 128>}]} {
    %c0 = arith.constant 0 : index
    %c0_0 = arith.constant 0 : index
    %c0_1 = arith.constant 0 : index
    %0 = vector.load %arg1[%c0, %c0_0, %c0_1] : memref<4x16x128xf32, #tpu.memory_space<vmem>>, vector<4x16x128xf32>
    %c0_2 = arith.constant 0 : index
    %c0_3 = arith.constant 0 : index
    %1 = vector.load %arg2[%c0_2, %c0_3] : memref<128x1xf32, #tpu.memory_space<vmem>>, vector<128x1xf32>
    "tpu.trace_start"() <{level = 10 : i32, message = "btf,fo->bto"}> : () -> ()
    %cst = arith.constant dense<0.000000e+00> : vector<4x16x1xf32>
    %2 = tpu.matmul %0, %1, %cst {dimension_numbers = #tpu.dot_dimension_numbers<[2], [0], [0, 1], [1], [0, 0, 0, 1, 1, 1], [], []>} : vector<4x16x128xf32>, vector<128x1xf32>, vector<4x16x1xf32> -> vector<4x16x1xf32>
    "tpu.trace_stop"() : () -> ()
    %c0_4 = arith.constant 0 : index
    %c0_5 = arith.constant 0 : index
    %3 = vector.load %arg3[%c0_4, %c0_5] : memref<16x1xf32, #tpu.memory_space<vmem>>, vector<16x1xf32>
    %4 = vector.shape_cast %3 : vector<16x1xf32> to vector<1x16x1xf32>
    %5 = vector.broadcast %4 : vector<1x16x1xf32> to vector<4x16x1xf32>
    %6 = arith.addf %2, %5 : vector<4x16x1xf32>
    %7 = math.tanh %6 : vector<4x16x1xf32>
    %8 = math.exp %7 : vector<4x16x1xf32>
    %cst_6 = arith.constant dense<0.000000e+00> : vector<4x1xf32>
    %9 = vector.multi_reduction <add>, %8, %cst_6 [1] : vector<4x16x1xf32> to vector<4x1xf32>
    %10 = vector.shape_cast %9 : vector<4x1xf32> to vector<4x1x1xf32>
    %11 = tpu.reciprocal %10 : vector<4x1x1xf32> -> vector<4x1x1xf32>
    %12 = vector.broadcast %11 : vector<4x1x1xf32> to vector<4x16x1xf32>
    %13 = arith.mulf %8, %12 : vector<4x16x1xf32>
    %cst_7 = arith.constant 1.000000e-10 : f32
    %14 = vector.broadcast %cst_7 : f32 to vector<4x16x1xf32>
    %15 = arith.addf %13, %14 : vector<4x16x1xf32>
    %16 = vector.broadcast %15 : vector<4x16x1xf32> to vector<4x16x128xf32>
    %17 = arith.mulf %0, %16 : vector<4x16x128xf32>
    %cst_8 = arith.constant dense<0.000000e+00> : vector<4x128xf32>
    %18 = vector.multi_reduction <add>, %17, %cst_8 [1] : vector<4x16x128xf32> to vector<4x128xf32>
    %c0_9 = arith.constant 0 : index
    %c0_10 = arith.constant 0 : index
    %19 = vector.load %arg4[%c0_9, %c0_10] : memref<4x128xf32, #tpu.memory_space<vmem>>, vector<4x128xf32>
    tpu.vector_store %arg4[%c0_9, %c0_10], %18 {strides = array<i32>} : memref<4x128xf32, #tpu.memory_space<vmem>>, vector<4x128xf32>,
    return
  }
  func.func @transform_0(%arg0: i32) -> (i32, i32, i32) {
    %c0_i32 = arith.constant 0 : i32
    %c0_i32_0 = arith.constant 0 : i32
    %c0_i32_1 = arith.constant 0 : i32
    return %arg0, %c0_i32, %c0_i32_0 : i32, i32, i32
  }
  func.func @transform_1(%arg0: i32) -> (i32, i32) {
    %c0_i32 = arith.constant 0 : i32
    %c0_i32_0 = arith.constant 0 : i32
    %c0_i32_1 = arith.constant 0 : i32
    return %c0_i32, %c0_i32_0 : i32, i32
  }
  func.func @transform_2(%arg0: i32) -> (i32, i32) {
    %c0_i32 = arith.constant 0 : i32
    %c0_i32_0 = arith.constant 0 : i32
    %c0_i32_1 = arith.constant 0 : i32
    return %c0_i32, %c0_i32_0 : i32, i32
  }
  func.func @transform_3(%arg0: i32) -> (i32, i32) {
    %c0_i32 = arith.constant 0 : i32
    %c0_i32_0 = arith.constant 0 : i32
    return %arg0, %c0_i32 : i32, i32
  }
}

</mosaic_0001>

<llo_original>
// kernel: attention_forward.1
$region0: #{attention_forward.1}
  #allocation0 [shape = 'u32[]', space=smem, size = 0x4, offset = 0x4, fixed_abs, tag = 'smem constant byte address 0x4 - core index']
  #allocation1 [shape = 'u32[144,128]{1,0:T(1,128)}', space=vmem, size = 0x12000, scoped, tag = 'internal scratch']
  %s0 = inlined_call_operand.vmem [shape: f32[4,16,128], index: 0, kind: input, shape index: {}]
  %s1 = inlined_call_operand.vmem [shape: f32[128,1], index: 1, kind: input, shape index: {}]
  %s2 = inlined_call_operand.vmem [shape: f32[16,1], index: 2, kind: input, shape index: {}]
  %s3 = inlined_call_operand.hbm [shape: f32[4,128], index: 3, kind: output, shape index: {}]
  %s4 = sld [smem:[#allocation0]]
  $region22: #{attention_forward.1} parent=0
    _
  %s6 = ssub.s32 1, %s4
  %s7 = scalar_select 0, %s6, %s4
  $region1: #{attention_forward.1} parent=0
    #allocation2 [shape = 'u8[2048]{0}', space=vmem, size = 0x800, scoped, tag = 'output window, operand 0, single buffered']
    #allocation3 [shape = 's32[1]{0}', space=sflag, size = 0x4, scoped, tag = 'scoped memory for attention_forward.1']
    %8 = vsyncpa [#allocation3], 0
    // Predicated region
    $region2: #{attention_forward.1} parent=1 // pred_check
      _
    $region3: #{attention_forward.1} parent=1 // pred_check_branch
      %10 = sbr.rel (0) target = $region5
    $region4: #{attention_forward.1} parent=1 // pred_region
      _
    $region5: #{attention_forward.1} parent=1 // pred_fallthru
      _
    // Predicated region
    $region6: #{attention_forward.1} parent=1 // pred_check
      _
    $region7: #{attention_forward.1} parent=1 // pred_check_branch
      %12 = sbr.rel (0) target = $region9
    $region8: #{attention_forward.1} parent=1 // pred_region
      _
    $region9: #{attention_forward.1} parent=1 // pred_fallthru
      _
    // Predicated region
    $region10: #{attention_forward.1} parent=1 // pred_check
      _
    $region11: #{attention_forward.1} parent=1 // pred_check_branch
      %14 = sbr.rel (0) target = $region13
    $region12: #{attention_forward.1} parent=1 // pred_region
      _
    $region13: #{attention_forward.1} parent=1 // pred_fallthru
      _
    %v15 = vld [vmem:[%s0] sm:$0xff]
    %v16 = vld [vmem:[%s0 + $0x8] sm:$0xff]
    %v17 = vld [vmem:[%s0 + $0x10] sm:$0xff]
    %v18 = vld [vmem:[%s0 + $0x18] sm:$0xff]
    %v19 = vld [vmem:[%s0 + $0x20] sm:$0xff]
    %v20 = vld [vmem:[%s0 + $0x28] sm:$0xff]
    %v21 = vld [vmem:[%s0 + $0x30] sm:$0xff]
    %v22 = vld [vmem:[%s0 + $0x38] sm:$0xff]
    %v23 = vld [vmem:[%s1] sm:$0xff]
    %v24 = vld [vmem:[%s1 + $0x8] sm:$0xff]
    %v25 = vld [vmem:[%s1 + $0x10] sm:$0xff]
    %v26 = vld [vmem:[%s1 + $0x18] sm:$0xff]
    %v27 = vld [vmem:[%s1 + $0x20] sm:$0xff]
    %v28 = vld [vmem:[%s1 + $0x28] sm:$0xff]
    %v29 = vld [vmem:[%s1 + $0x30] sm:$0xff]
    %v30 = vld [vmem:[%s1 + $0x38] sm:$0xff]
    %v31 = vld [vmem:[%s1 + $0x40] sm:$0xff]
    %v32 = vld [vmem:[%s1 + $0x48] sm:$0xff]
    %v33 = vld [vmem:[%s1 + $0x50] sm:$0xff]
    %v34 = vld [vmem:[%s1 + $0x58] sm:$0xff]
    %v35 = vld [vmem:[%s1 + $0x60] sm:$0xff]
    %v36 = vld [vmem:[%s1 + $0x68] sm:$0xff]
    %v37 = vld [vmem:[%s1 + $0x70] sm:$0xff]
    %v38 = vld [vmem:[%s1 + $0x78] sm:$0xff]
    %v39 = vld [vmem:[%s2] sm:$0xff]
    %v40 = vld [vmem:[%s2 + $0x8] sm:$0xff]
    %41 = vmatprep.subr.mxu0 0.0
    %42 = vmatpush1.msra.mxu0 %v23
    %43 = vmatprep.subr.mxu0 0.0
    %44 = vmatpush1.msra.mxu0 %v24
    %45 = vmatprep.subr.mxu0 0.0
    %46 = vmatpush1.msra.mxu0 %v25
    %47 = vmatprep.subr.mxu0 0.0
    %48 = vmatpush1.msra.mxu0 %v26
    %49 = vmatprep.subr.mxu0 0.0
    %50 = vmatpush1.msra.mxu0 %v27
    %51 = vmatprep.subr.mxu0 0.0
    %52 = vmatpush1.msra.mxu0 %v28
    %53 = vmatprep.subr.mxu0 0.0
    %54 = vmatpush1.msra.mxu0 %v29
    %55 = vmatprep.subr.mxu0 0.0
    %56 = vmatpush1.msra.mxu0 %v30
    %57 = vmatprep.subr.mxu0 0.0
    %58 = vmatpush1.msra.mxu0 %v31
    %59 = vmatprep.subr.mxu0 0.0
    %60 = vmatpush1.msra.mxu0 %v32
    %61 = vmatprep.subr.mxu0 0.0
    %62 = vmatpush1.msra.mxu0 %v33
    %63 = vmatprep.subr.mxu0 0.0
    %64 = vmatpush1.msra.mxu0 %v34
    %65 = vmatprep.subr.mxu0 0.0
    %66 = vmatpush1.msra.mxu0 %v35
    %67 = vmatprep.subr.mxu0 0.0
    %68 = vmatpush1.msra.mxu0 %v36
    %69 = vmatprep.subr.mxu0 0.0
    %70 = vmatpush1.msra.mxu0 %v37
    %71 = vmatprep.subr.mxu0 0.0
    %72 = vmatpush1.msra.mxu0 %v38
    %73 = vmatprep.subr.mxu0 0.0
    %74 = vmatpush1.msra.mxu0 0.0
    %75 = vmatprep.subr.mxu0 0.0
    %76 = vmatpush1.msra.mxu0 0.0
    %77 = vmatprep.subr.mxu0 0.0
    %78 = vmatpush1.msra.mxu0 0.0
    %79 = vmatprep.subr.mxu0 0.0
    %80 = vmatpush1.msra.mxu0 0.0
    %81 = vmatprep.subr.mxu0 0.0
    %82 = vmatpush1.msra.mxu0 0.0
    %83 = vmatprep.subr.mxu0 0.0
    %84 = vmatpush1.msra.mxu0 0.0
    %85 = vmatprep.subr.mxu0 0.0
    %86 = vmatpush1.msra.mxu0 0.0
    %87 = vmatprep.subr.mxu0 0.0
    %88 = vmatpush1.msra.mxu0 0.0
    %89 = vmatprep.subr.mxu0 0.0
    %90 = vmatpush1.msra.mxu0 0.0
    %91 = vmatprep.subr.mxu0 0.0
    %92 = vmatpush1.msra.mxu0 0.0
    %93 = vmatprep.subr.mxu0 0.0
    %94 = vmatpush1.msra.mxu0 0.0
    %95 = vmatprep.subr.mxu0 0.0
    %96 = vmatpush1.msra.mxu0 0.0
    %97 = vmatprep.subr.mxu0 0.0
    %98 = vmatpush1.msra.mxu0 0.0
    %99 = vmatprep.subr.mxu0 0.0
    %100 = vmatpush1.msra.mxu0 0.0
    %101 = vmatprep.subr.mxu0 0.0
    %102 = vmatpush1.msra.mxu0 0.0
    %103 = vmatprep.subr.mxu0 0.0
    %104 = vmatpush1.msra.mxu0 0.0
    %105 = vmatprep.mubr.f32.mxu0 0.0
    %106 = vmatmul.mubr.f32.gmra.mrb[0].mxu0 %v15
    %v107 = vpop.f32.mrb[0].mxu0
    %v108 = vadd.f32 %v39, %v107
    %v109 = vpop.f32.mrb[0].mxu0
    %110 = vmatprep.mubr.f32.mxu0 0.0
    %111 = vmatmul.mubr.f32.gmra.mrb[0].mxu0 %v16
    %v112 = vpop.f32.mrb[0].mxu0
    %v113 = vadd.f32 %v40, %v112
    %v114 = vpop.f32.mrb[0].mxu0
    %115 = vmatprep.mubr.f32.mxu0 0.0
    %116 = vmatmul.mubr.f32.gmra.mrb[0].mxu0 %v17
    %v117 = vpop.f32.mrb[0].mxu0
    %v118 = vadd.f32 %v39, %v117
    %v119 = vpop.f32.mrb[0].mxu0
    %120 = vmatprep.mubr.f32.mxu0 0.0
    %121 = vmatmul.mubr.f32.gmra.mrb[0].mxu0 %v18
    %v122 = vpop.f32.mrb[0].mxu0
    %v123 = vadd.f32 %v40, %v122
    %v124 = vpop.f32.mrb[0].mxu0
    %125 = vmatprep.mubr.f32.mxu0 0.0
    %126 = vmatmul.mubr.f32.gmra.mrb[0].mxu0 %v19
    %v127 = vpop.f32.mrb[0].mxu0
    %v128 = vadd.f32 %v39, %v127
    %v129 = vpop.f32.mrb[0].mxu0
    %130 = vmatprep.mubr.f32.mxu0 0.0
    %131 = vmatmul.mubr.f32.gmra.mrb[0].mxu0 %v20
    %v132 = vpop.f32.mrb[0].mxu0
    %v133 = vadd.f32 %v40, %v132
    %v134 = vpop.f32.mrb[0].mxu0
    %135 = vmatprep.mubr.f32.mxu0 0.0
    %136 = vmatmul.mubr.f32.gmra.mrb[0].mxu0 %v21
    %v137 = vpop.f32.mrb[0].mxu0
    %v138 = vadd.f32 %v39, %v137
    %v139 = vpop.f32.mrb[0].mxu0
    %140 = vmatprep.mubr.f32.mxu0 0.0
    %141 = vmatmul.mubr.f32.gmra.mrb[0].mxu0 %v22
    %v142 = vpop.f32.mrb[0].mxu0
    %v143 = vadd.f32 %v40, %v142
    %v144 = vpop.f32.mrb[0].mxu0
    %145 = vdwg.mxu0
    %v146 = vtanh.pop %v108
    %v147 = vtanh.pop %v113
    %v148 = vtanh.pop %v118
    %v149 = vtanh.pop %v123
    %v150 = vtanh.pop %v128
    %v151 = vtanh.pop %v133
    %v152 = vtanh.pop %v138
    %v153 = vtanh.pop %v143
    %v154 = vmul.f32 %v146, 1.442695
    %v155 = vpow.pop %v154
    %v156 = vmul.f32 %v147, 1.442695
    %v157 = vpow.pop %v156
    %v158 = vmul.f32 %v148, 1.442695
    %v159 = vpow.pop %v158
    %v160 = vmul.f32 %v149, 1.442695
    %v161 = vpow.pop %v160
    %v162 = vmul.f32 %v150, 1.442695
    %v163 = vpow.pop %v162
    %v164 = vmul.f32 %v151, 1.442695
    %v165 = vpow.pop %v164
    %v166 = vmul.f32 %v152, 1.442695
    %v167 = vpow.pop %v166
    %v168 = vmul.f32 %v153, 1.442695
    %v169 = vpow.pop %v168
    %vm170 = vcmask 7168
    %v171 = vsel %vm170, %v155, 0.0
    %v172 = vsel %vm170, %v157, 0.0
    %v173 = vadd.f32 %v171, %v172
    %v174 = vrot.slane %v173, 4
    %v175 = vadd.f32 %v173, %v174
    %v176 = vrot.slane %v175, 2
    %v177 = vadd.f32 %v175, %v176
    %v178 = vrot.slane %v177, 1
    %v179 = vadd.f32 %v177, %v178
    %v180 = vsel %vm170, %v159, 0.0
    %v181 = vsel %vm170, %v161, 0.0
    %v182 = vadd.f32 %v180, %v181
    %v183 = vrot.slane %v182, 4
    %v184 = vadd.f32 %v182, %v183
    %v185 = vrot.slane %v184, 2
    %v186 = vadd.f32 %v184, %v185
    %v187 = vrot.slane %v186, 1
    %v188 = vadd.f32 %v186, %v187
    %v189 = vsel %vm170, %v163, 0.0
    %v190 = vsel %vm170, %v165, 0.0
    %v191 = vadd.f32 %v189, %v190
    %v192 = vrot.slane %v191, 4
    %v193 = vadd.f32 %v191, %v192
    %v194 = vrot.slane %v193, 2
    %v195 = vadd.f32 %v193, %v194
    %v196 = vrot.slane %v195, 1
    %v197 = vadd.f32 %v195, %v196
    %v198 = vsel %vm170, %v167, 0.0
    %v199 = vsel %vm170, %v169, 0.0
    %v200 = vadd.f32 %v198, %v199
    %v201 = vrot.slane %v200, 4
    %v202 = vadd.f32 %v200, %v201
    %v203 = vrot.slane %v202, 2
    %v204 = vadd.f32 %v202, %v203
    %v205 = vrot.slane %v204, 1
    %v206 = vadd.f32 %v204, %v205
    %v207 = vrcp.pop %v179
    %v208 = vrcp.pop %v188
    %v209 = vrcp.pop %v197
    %v210 = vrcp.pop %v206
    %v211 = vmul.f32 %v155, %v207
    %v212 = vmul.f32 %v157, %v207
    %v213 = vmul.f32 %v159, %v208
    %v214 = vmul.f32 %v161, %v208
    %v215 = vmul.f32 %v163, %v209
    %v216 = vmul.f32 %v165, %v209
    %v217 = vmul.f32 %v167, %v210
    %v218 = vmul.f32 %v169, %v210
    %v219 = vadd.f32 %v211, 1e-10
    %v220 = vadd.f32 %v212, 1e-10
    %v221 = vadd.f32 %v213, 1e-10
    %v222 = vadd.f32 %v214, 1e-10
    %v223 = vadd.f32 %v215, 1e-10
    %v224 = vadd.f32 %v216, 1e-10
    %v225 = vadd.f32 %v217, 1e-10
    %v226 = vadd.f32 %v218, 1e-10
    %228 = vset.pattern.permute.xlu0 0
    %229 = vperm.xlu0 %228, %v219
    %v230 = vpop.permute.xlu0 %229
    %233 = vset.pattern.permute.xlu0 0
    %234 = vperm.xlu0 %233, %v220
    %v235 = vpop.permute.xlu0 %234
    %238 = vset.pattern.permute.xlu0 0
    %239 = vperm.xlu0 %238, %v221
    %v240 = vpop.permute.xlu0 %239
    %243 = vset.pattern.permute.xlu0 0
    %244 = vperm.xlu0 %243, %v222
    %v245 = vpop.permute.xlu0 %244
    %248 = vset.pattern.permute.xlu0 0
    %249 = vperm.xlu0 %248, %v223
    %v250 = vpop.permute.xlu0 %249
    %253 = vset.pattern.permute.xlu0 0
    %254 = vperm.xlu0 %253, %v224
    %v255 = vpop.permute.xlu0 %254
    %258 = vset.pattern.permute.xlu0 0
    %259 = vperm.xlu0 %258, %v225
    %v260 = vpop.permute.xlu0 %259
    %263 = vset.pattern.permute.xlu0 0
    %264 = vperm.xlu0 %263, %v226
    %v265 = vpop.permute.xlu0 %264
    %v267 = vmul.f32 %v15, %v230
    %v268 = vmul.f32 %v16, %v235
    %v269 = vmul.f32 %v17, %v240
    %v270 = vmul.f32 %v18, %v245
    %v271 = vmul.f32 %v19, %v250
    %v272 = vmul.f32 %v20, %v255
    %v273 = vmul.f32 %v21, %v260
    %v274 = vmul.f32 %v22, %v265
    %v275 = vadd.f32 %v267, %v268
    %v276 = vrot.slane %v275, 4
    %v277 = vadd.f32 %v275, %v276
    %v278 = vrot.slane %v277, 2
    %v279 = vadd.f32 %v277, %v278
    %v280 = vrot.slane %v279, 1
    %v281 = vadd.f32 %v279, %v280
    %v282 = vadd.f32 %v269, %v270
    %v283 = vrot.slane %v282, 4
    %v284 = vadd.f32 %v282, %v283
    %v285 = vrot.slane %v284, 2
    %v286 = vadd.f32 %v284, %v285
    %v287 = vrot.slane %v286, 1
    %v288 = vadd.f32 %v286, %v287
    %v289 = vadd.f32 %v271, %v272
    %v290 = vrot.slane %v289, 4
    %v291 = vadd.f32 %v289, %v290
    %v292 = vrot.slane %v291, 2
    %v293 = vadd.f32 %v291, %v292
    %v294 = vrot.slane %v293, 1
    %v295 = vadd.f32 %v293, %v294
    %v296 = vadd.f32 %v273, %v274
    %v297 = vrot.slane %v296, 4
    %v298 = vadd.f32 %v296, %v297
    %v299 = vrot.slane %v298, 2
    %v300 = vadd.f32 %v298, %v299
    %v301 = vrot.slane %v300, 1
    %v302 = vadd.f32 %v300, %v301
    %vm307 = vcmask 1041409
    %v308 = vsel %vm307, %v288, %v281
    %vm309 = vcmask 1042434
    %v310 = vsel %vm309, %v295, %v308
    %vm311 = vcmask 1043459
    %v312 = vsel %vm311, %v302, %v310
    %314 = vst [vmem:[#allocation2] sm:$0xf] %v312
    // Predicated region
    $region14: #{attention_forward.1} parent=1 // pred_check
      _
    $region15: #{attention_forward.1} parent=1 // pred_check_branch
      %316 = sbr.rel (0) target = $region17
    $region16: #{attention_forward.1} parent=1 // pred_region
      %s318 = ssub.s32 64, 64
      %319 = vsyncadd [#allocation3], %s318
      %s321 = sshll.u32 [#allocation2], 4
      %s322 = int_to_ptr.vmem [resolvable:$true] %s321
      %324 = dma.vmem_to_hbm [thread:$0]  %s322, 64, %s3, [#allocation3]
    $region17: #{attention_forward.1} parent=1 // pred_fallthru
      _
    // Predicated region
    $region18: #{attention_forward.1} parent=1 // pred_check
      _
    $region19: #{attention_forward.1} parent=1 // pred_check_branch
      %326 = sbr.rel (0) target = $region21
    $region20: #{attention_forward.1} parent=1 // pred_region
      %327 = dma.done [#allocation3], 64
    $region21: #{attention_forward.1} parent=1 // pred_fallthru
      _
    %328 = vsyncpa [#allocation3], 1

</llo_original>
